<compile_context>
chip_gen: v6e
topology: v6e:2x2x1
jax: 0.10.0
libtpu: 0.0.40
codegen_flags: <defaults>
</compile_context>

<pallas_src>
import functools

import jax
import jax.numpy as jnp
from jax.experimental import pallas as pl
from jax.experimental.pallas import tpu as pltpu


def _round_up(n, m):
    return ((n + m - 1) // m) * m


# ---------------------------------------------------------------------------
# Kernel body: three lane-dense 2-D MXU matmuls over one batch tile.
# ---------------------------------------------------------------------------
def encoder_kernel(x_ref, w1_ref, b1_ref, w2_ref, b2_ref, w3_ref, b3_ref, out_ref):
    # x_ref:  (TB, C*D)    one batch tile, contacts flattened with channels
    # w1_ref: (C*D, C*H)   block-diagonal kron(I_C, W1)   (bf16 or f32)
    # w2_ref: (C*H, C*H)   block-diagonal kron(I_C, W2)
    # w3_ref: (C*H, Zp)    final projection, z_dim zero-padded to 128 lanes
    # b*_ref: (1, ...)     f32 broadcast biases
    # out_ref:(TB, Zp)     f32
    cdt = w1_ref.dtype  # matmul operand dtype; accumulation is always f32

    # Linear(channel_dim, 32) per contact (block-diagonal) + LeakyReLU(0.2)
    h1 = jnp.dot(x_ref[...], w1_ref[...], preferred_element_type=jnp.float32)
    h1 = h1 + b1_ref[...]
    h1 = jnp.where(h1 > 0, h1, 0.2 * h1)

    # Linear(32, 32) per contact (block-diagonal) + LeakyReLU(0.2)
    h2 = jnp.dot(h1.astype(cdt), w2_ref[...], preferred_element_type=jnp.float32)
    h2 = h2 + b2_ref[...]
    h2 = jnp.where(h2 > 0, h2, 0.2 * h2)

    # h2 is already the per-batch flattened (C*32) vector -> final projection.
    out_ref[...] = (
        jnp.dot(h2.astype(cdt), w3_ref[...], preferred_element_type=jnp.float32)
        + b3_ref[...]
    ).astype(out_ref.dtype)


# ---------------------------------------------------------------------------
# One-time parameter fold (call once per parameter set, outside the forward).
# ---------------------------------------------------------------------------
def prepare_encoder_params(params, fixed_num_of_contact, *, compute_dtype=jnp.bfloat16):
    """Fold per-contact Linears into block-diagonal weights + pad the output dim.

    Returns a tuple of 6 device arrays reused by every encoder_forward call,
    so the kron / tile / pad work is NOT re-done per forward.
    """
    w1, b1, w2, b2, w3, b3 = params
    C = fixed_num_of_contact
    H = w1.shape[1]           # 32
    Z = w3.shape[1]           # z_dim
    CH = C * H

    eye_c = jnp.eye(C, dtype=jnp.float32)
    w1_big = jnp.kron(eye_c, w1.astype(jnp.float32)).astype(compute_dtype)  # (C*D, C*H)
    w2_big = jnp.kron(eye_c, w2.astype(jnp.float32)).astype(compute_dtype)  # (C*H, C*H)
    b1_big = jnp.tile(b1.astype(jnp.float32), C).reshape(1, CH)
    b2_big = jnp.tile(b2.astype(jnp.float32), C).reshape(1, CH)

    # Lane-dense output: pad z_dim up to a multiple of 128 with zero columns.
    Zp = _round_up(max(Z, 128), 128)
    w3_p = (
        jnp.zeros((CH, Zp), jnp.float32).at[:, :Z].set(w3.astype(jnp.float32))
    ).astype(compute_dtype)
    b3_p = jnp.zeros((1, Zp), jnp.float32).at[:, :Z].set(b3.astype(jnp.float32))

    return (w1_big, b1_big, w2_big, b2_big, w3_p, b3_p)


def _choose_batch_tile(B, cap=1024):
    """Pick (tb, B_pad): large tiles, >=2 grid steps (v7x megacore), tiny/no pad."""
    if B <= 8:
        return B, B                                 # single full-extent block, no pad
    steps = max(2, pl.cdiv(B, cap))                 # at least 2 steps to shard across TCs
    tb = min(_round_up(pl.cdiv(B, steps), 8), _round_up(cap, 8))
    b_pad = _round_up(B, tb)                        # pads less than one tile of rows
    return tb, b_pad


# ---------------------------------------------------------------------------
# Forward pass.
# ---------------------------------------------------------------------------
@functools.partial(jax.jit, static_argnames=("z_dim", "tile_cap"))
def encoder_forward(x, folded_params, *, z_dim, tile_cap=1024):
    """x: (B, fixed_num_of_contact, channel_dim) -> (B, z_dim) float32."""
    w1, b1, w2, b2, w3, b3 = folded_params
    B, C, D = x.shape
    CD, CH = w1.shape
    Zp = w3.shape[1]
    assert CD == C * D, "folded params do not match input contact/channel dims"

    # Contact-major flatten (matches kron(I_C, W) block layout) + operand dtype.
    x2 = x.reshape(B, CD).astype(w1.dtype)

    tb, b_pad = _choose_batch_tile(B, tile_cap)
    if b_pad != B:
        x2 = jnp.pad(x2, ((0, b_pad - B), (0, 0)))

    grid = (b_pad // tb,)
    itemsize = jnp.dtype(w1.dtype).itemsize
    cost = pl.CostEstimate(
        flops=2 * b_pad * (CD * CH + CH * CH + CH * Zp),
        transcendentals=0,
        bytes_accessed=(
            b_pad * CD * itemsize                       # x in
            + b_pad * Zp * 4                            # out
            + (CD * CH + CH * CH + CH * Zp) * itemsize  # folded weights
            + (2 * CH + Zp) * 4                         # biases
        ),
    )

    out = pl.pallas_call(
        encoder_kernel,
        out_shape=jax.ShapeDtypeStruct((b_pad, Zp), jnp.float32),
        grid=grid,
        in_specs=[
            pl.BlockSpec((tb, CD), lambda i: (i, 0)),   # activation tile marches over B
            pl.BlockSpec((CD, CH), lambda i: (0, 0)),   # weights/biases: constant block
            pl.BlockSpec((1, CH), lambda i: (0, 0)),    #   index -> stay VMEM-resident
            pl.BlockSpec((CH, CH), lambda i: (0, 0)),
            pl.BlockSpec((1, CH), lambda i: (0, 0)),
            pl.BlockSpec((CH, Zp), lambda i: (0, 0)),
            pl.BlockSpec((1, Zp), lambda i: (0, 0)),
        ],
        out_specs=pl.BlockSpec((tb, Zp), lambda i: (i, 0)),
        compiler_params=pltpu.CompilerParams(
            dimension_semantics=("parallel",),
        ),
        cost_estimate=cost,
    )(x2, w1, b1, w2, b2, w3, b3)

    # Padded batch rows / padded z columns are dropped inside the same jit.
    return out[:B, :z_dim]


# ---------------------------------------------------------------------------
# Reference + synthetic init (PyTorch Linear weights stored transposed: (in, out)).
# ---------------------------------------------------------------------------
def init_params(key, channel_dim, fixed_num_of_contact, z_dim):
    k1, k2, k3, k4, k5, k6 = jax.random.split(key, 6)
    scale = 0.1
    w1 = scale * jax.random.normal(k1, (channel_dim, 32), jnp.float32)
    b1 = scale * jax.random.normal(k2, (32,), jnp.float32)
    w2 = scale * jax.random.normal(k3, (32, 32), jnp.float32)
    b2 = scale * jax.random.normal(k4, (32,), jnp.float32)
    w3 = scale * jax.random.normal(k5, (32 * fixed_num_of_contact, z_dim), jnp.float32)
    b3 = scale * jax.random.normal(k6, (z_dim,), jnp.float32)
    return (w1, b1, w2, b2, w3, b3)


def encoder_reference(x, params):
    """Pure-JAX f32 reference of the PyTorch forward (correctness check)."""
    w1, b1, w2, b2, w3, b3 = params
    x = x.astype(jnp.float32)
    h = x @ w1 + b1
    h = jnp.where(h > 0, h, 0.2 * h)
    h = h @ w2 + b2
    h = jnp.where(h > 0, h, 0.2 * h)
    h = h.reshape(x.shape[0], -1)
    return h @ w3 + b3


if __name__ == "__main__":
    # Small shapes consistent with the module.
    B = 2                      # batch
    fixed_num_of_contact = 8   # contacts (second axis)
    channel_dim = 4            # per-contact feature dim
    z_dim = 32                 # latent dim

    key = jax.random.PRNGKey(0)
    kx, kp = jax.random.split(key)
    x = jax.random.normal(kx, (B, fixed_num_of_contact, channel_dim), jnp.float32)
    params = init_params(kp, channel_dim, fixed_num_of_contact, z_dim)

    # Default fast path: bf16 matmul operands, f32 accumulation.
    folded_bf16 = prepare_encoder_params(
        params, fixed_num_of_contact, compute_dtype=jnp.bfloat16
    )
    out = jax.block_until_ready(encoder_forward(x, folded_bf16, z_dim=z_dim))
    ref = encoder_reference(x, params)
    assert out.shape == (B, z_dim)
    assert jnp.allclose(out, ref, atol=5e-2, rtol=5e-2), "bf16 path mismatch vs reference"

    # Larger ragged batch: exercises the >1-step parallel grid + small tail pad.
    x_big = jax.random.normal(
        jax.random.PRNGKey(1), (20, fixed_num_of_contact, channel_dim), jnp.float32
    )
    out_big = jax.block_until_ready(encoder_forward(x_big, folded_bf16, z_dim=z_dim))
    ref_big = encoder_reference(x_big, params)
    assert out_big.shape == (20, z_dim)
    assert jnp.allclose(out_big, ref_big, atol=5e-2, rtol=5e-2), "bf16 grid path mismatch"

    # f32 operand path (exact check) with a tiny tile cap to force several grid steps.
    folded_f32 = prepare_encoder_params(
        params, fixed_num_of_contact, compute_dtype=jnp.float32
    )
    out_f32 = jax.block_until_ready(
        encoder_forward(x_big, folded_f32, z_dim=z_dim, tile_cap=8)
    )
    assert jnp.allclose(out_f32, ref_big, atol=1e-4, rtol=1e-4), "f32 path mismatch"

    print("KERNEL_OK")
</pallas_src>

<mosaic_0001>
module attributes {stable_mosaic.version = 11 : i64} {
  func.func @encoder_kernel(%arg0: i32, %arg1: memref<2x32xbf16, #tpu.memory_space<vmem>>, %arg2: memref<32x256xbf16, #tpu.memory_space<vmem>>, %arg3: memref<1x256xf32, #tpu.memory_space<vmem>>, %arg4: memref<256x256xbf16, #tpu.memory_space<vmem>>, %arg5: memref<1x256xf32, #tpu.memory_space<vmem>>, %arg6: memref<256x128xbf16, #tpu.memory_space<vmem>>, %arg7: memref<1x128xf32, #tpu.memory_space<vmem>>, %arg8: memref<2x128xf32, #tpu.memory_space<vmem>>) attributes {dimension_semantics = [#tpu.dimension_semantics<parallel>], iteration_bounds = array<i64: 1>, scalar_prefetch = 0 : i64, scratch_operands = 0 : i64, tpu.core_type = #tpu.core_type<tc>, window_params = [{transform_indices = @transform_0, window_bounds = array<i64: 2, 32>}, {pipeline_mode = #tpu.pipeline_mode<synchronous>, transform_indices = @transform_1, window_bounds = array<i64: 32, 256>}, {pipeline_mode = #tpu.pipeline_mode<synchronous>, transform_indices = @transform_2, window_bounds = array<i64: 1, 256>}, {pipeline_mode = #tpu.pipeline_mode<synchronous>, transform_indices = @transform_3, window_bounds = array<i64: 256, 256>}, {pipeline_mode = #tpu.pipeline_mode<synchronous>, transform_indices = @transform_4, window_bounds = array<i64: 1, 256>}, {pipeline_mode = #tpu.pipeline_mode<synchronous>, transform_indices = @transform_5, window_bounds = array<i64: 256, 128>}, {pipeline_mode = #tpu.pipeline_mode<synchronous>, transform_indices = @transform_6, window_bounds = array<i64: 1, 128>}, {transform_indices = @transform_7, window_bounds = array<i64: 2, 128>}]} {
    %c0 = arith.constant 0 : index
    %c0_0 = arith.constant 0 : index
    %0 = vector.load %arg1[%c0, %c0_0] : memref<2x32xbf16, #tpu.memory_space<vmem>>, vector<2x32xbf16>
    %c0_1 = arith.constant 0 : index
    %c0_2 = arith.constant 0 : index
    %1 = vector.load %arg2[%c0_1, %c0_2] : memref<32x256xbf16, #tpu.memory_space<vmem>>, vector<32x256xbf16>
    %cst = arith.constant dense<0.000000e+00> : vector<2x256xf32>
    %2 = tpu.matmul %0, %1, %cst {dimension_numbers = #tpu.dot_dimension_numbers<[1], [0], [0], [1], [0, 0, 1, 1], [], []>} : vector<2x32xbf16>, vector<32x256xbf16>, vector<2x256xf32> -> vector<2x256xf32>
    %c0_3 = arith.constant 0 : index
    %c0_4 = arith.constant 0 : index
    %3 = vector.load %arg3[%c0_3, %c0_4] : memref<1x256xf32, #tpu.memory_space<vmem>>, vector<1x256xf32>
    %4 = vector.broadcast %3 : vector<1x256xf32> to vector<2x256xf32>
    %5 = arith.addf %2, %4 : vector<2x256xf32>
    %cst_5 = arith.constant 0.000000e+00 : f32
    %6 = vector.broadcast %cst_5 : f32 to vector<2x256xf32>
    %7 = arith.cmpf ogt, %5, %6 : vector<2x256xf32>
    %cst_6 = arith.constant 2.000000e-01 : f32
    %8 = vector.broadcast %cst_6 : f32 to vector<2x256xf32>
    %9 = arith.mulf %8, %5 : vector<2x256xf32>
    %10 = arith.select %7, %5, %9 : vector<2x256xi1>, vector<2x256xf32>
    %11 = arith.truncf %10 : vector<2x256xf32> to vector<2x256xbf16>
    %c0_7 = arith.constant 0 : index
    %c0_8 = arith.constant 0 : index
    %12 = vector.load %arg4[%c0_7, %c0_8] : memref<256x256xbf16, #tpu.memory_space<vmem>>, vector<256x256xbf16>
    %cst_9 = arith.constant dense<0.000000e+00> : vector<2x256xf32>
    %13 = tpu.matmul %11, %12, %cst_9 {dimension_numbers = #tpu.dot_dimension_numbers<[1], [0], [0], [1], [0, 0, 1, 1], [], []>} : vector<2x256xbf16>, vector<256x256xbf16>, vector<2x256xf32> -> vector<2x256xf32>
    %c0_10 = arith.constant 0 : index
    %c0_11 = arith.constant 0 : index
    %14 = vector.load %arg5[%c0_10, %c0_11] : memref<1x256xf32, #tpu.memory_space<vmem>>, vector<1x256xf32>
    %15 = vector.broadcast %14 : vector<1x256xf32> to vector<2x256xf32>
    %16 = arith.addf %13, %15 : vector<2x256xf32>
    %cst_12 = arith.constant 0.000000e+00 : f32
    %17 = vector.broadcast %cst_12 : f32 to vector<2x256xf32>
    %18 = arith.cmpf ogt, %16, %17 : vector<2x256xf32>
    %cst_13 = arith.constant 2.000000e-01 : f32
    %19 = vector.broadcast %cst_13 : f32 to vector<2x256xf32>
    %20 = arith.mulf %19, %16 : vector<2x256xf32>
    %21 = arith.select %18, %16, %20 : vector<2x256xi1>, vector<2x256xf32>
    %22 = arith.truncf %21 : vector<2x256xf32> to vector<2x256xbf16>
    %c0_14 = arith.constant 0 : index
    %c0_15 = arith.constant 0 : index
    %23 = vector.load %arg6[%c0_14, %c0_15] : memref<256x128xbf16, #tpu.memory_space<vmem>>, vector<256x128xbf16>
    %cst_16 = arith.constant dense<0.000000e+00> : vector<2x128xf32>
    %24 = tpu.matmul %22, %23, %cst_16 {dimension_numbers = #tpu.dot_dimension_numbers<[1], [0], [0], [1], [0, 0, 1, 1], [], []>} : vector<2x256xbf16>, vector<256x128xbf16>, vector<2x128xf32> -> vector<2x128xf32>
    %c0_17 = arith.constant 0 : index
    %c0_18 = arith.constant 0 : index
    %25 = vector.load %arg7[%c0_17, %c0_18] : memref<1x128xf32, #tpu.memory_space<vmem>>, vector<1x128xf32>
    %26 = vector.broadcast %25 : vector<1x128xf32> to vector<2x128xf32>
    %27 = arith.addf %24, %26 : vector<2x128xf32>
    %c0_19 = arith.constant 0 : index
    %c0_20 = arith.constant 0 : index
    %28 = vector.load %arg8[%c0_19, %c0_20] : memref<2x128xf32, #tpu.memory_space<vmem>>, vector<2x128xf32>
    tpu.vector_store %arg8[%c0_19, %c0_20], %27 {strides = array<i32>} : memref<2x128xf32, #tpu.memory_space<vmem>>, vector<2x128xf32>,
    return
  }
  func.func @transform_0(%arg0: i32) -> (i32, i32) {
    %c0_i32 = arith.constant 0 : i32
    %c0_i32_0 = arith.constant 0 : i32
    return %arg0, %c0_i32 : i32, i32
  }
  func.func @transform_1(%arg0: i32) -> (i32, i32) {
    %c0_i32 = arith.constant 0 : i32
    %c0_i32_0 = arith.constant 0 : i32
    %c0_i32_1 = arith.constant 0 : i32
    return %c0_i32, %c0_i32_0 : i32, i32
  }
  func.func @transform_2(%arg0: i32) -> (i32, i32) {
    %c0_i32 = arith.constant 0 : i32
    %c0_i32_0 = arith.constant 0 : i32
    %c0_i32_1 = arith.constant 0 : i32
    return %c0_i32, %c0_i32_0 : i32, i32
  }
  func.func @transform_3(%arg0: i32) -> (i32, i32) {
    %c0_i32 = arith.constant 0 : i32
    %c0_i32_0 = arith.constant 0 : i32
    %c0_i32_1 = arith.constant 0 : i32
    return %c0_i32, %c0_i32_0 : i32, i32
  }
  func.func @transform_4(%arg0: i32) -> (i32, i32) {
    %c0_i32 = arith.constant 0 : i32
    %c0_i32_0 = arith.constant 0 : i32
    %c0_i32_1 = arith.constant 0 : i32
    return %c0_i32, %c0_i32_0 : i32, i32
  }
  func.func @transform_5(%arg0: i32) -> (i32, i32) {
    %c0_i32 = arith.constant 0 : i32
    %c0_i32_0 = arith.constant 0 : i32
    %c0_i32_1 = arith.constant 0 : i32
    return %c0_i32, %c0_i32_0 : i32, i32
  }
  func.func @transform_6(%arg0: i32) -> (i32, i32) {
    %c0_i32 = arith.constant 0 : i32
    %c0_i32_0 = arith.constant 0 : i32
    %c0_i32_1 = arith.constant 0 : i32
    return %c0_i32, %c0_i32_0 : i32, i32
  }
  func.func @transform_7(%arg0: i32) -> (i32, i32) {
    %c0_i32 = arith.constant 0 : i32
    %c0_i32_0 = arith.constant 0 : i32
    return %arg0, %c0_i32 : i32, i32
  }
}

</mosaic_0001>

<llo_original>
// kernel: encoder_forward.1
$region0: #{encoder_forward.1}
  #allocation0 [shape = 'u32[]', space=smem, size = 0x4, offset = 0x4, fixed_abs, tag = 'smem constant byte address 0x4 - core index']
  #allocation1 [shape = 'u32[144,128]{1,0:T(1,128)}', space=vmem, size = 0x12000, scoped, tag = 'internal scratch']
  %s0 = inlined_call_operand.vmem [shape: bf16[2,32], index: 0, kind: input, shape index: {}]
  %s1 = inlined_call_operand.vmem [shape: bf16[32,256], index: 1, kind: input, shape index: {}]
  %s2 = inlined_call_operand.vmem [shape: f32[1,256], index: 2, kind: input, shape index: {}]
  %s3 = inlined_call_operand.hbm [shape: bf16[256,256], index: 3, kind: input, shape index: {}]
  %s4 = inlined_call_operand.vmem [shape: f32[1,256], index: 4, kind: input, shape index: {}]
  %s5 = inlined_call_operand.hbm [shape: bf16[256,128], index: 5, kind: input, shape index: {}]
  %s6 = inlined_call_operand.vmem [shape: f32[1,128], index: 6, kind: input, shape index: {}]
  %s7 = inlined_call_operand.hbm [shape: f32[2,128], index: 7, kind: output, shape index: {}]
  %s8 = sld [smem:[#allocation0]]
  $region46: #{encoder_forward.1} parent=0
    _
  %s10 = ssub.s32 1, %s8
  %s11 = scalar_select 0, %s10, %s8
  $region1: #{encoder_forward.1} parent=0
    #allocation2 [shape = 'u8[131072]{0}', space=vmem, size = 0x20000, scoped, tag = 'input window, operand 3, single buffered']
    #allocation3 [shape = 's32[1]{0}', space=sflag, size = 0x4, scoped, tag = 'scoped memory for encoder_forward.1']
    #allocation4 [shape = 's32[1]{0}', space=sflag, size = 0x4, scoped, tag = 'scoped memory for encoder_forward.1']
    #allocation5 [shape = 'u8[65536]{0}', space=vmem, size = 0x10000, scoped, tag = 'input window, operand 5, single buffered']
    #allocation6 [shape = 's32[1]{0}', space=sflag, size = 0x4, scoped, tag = 'scoped memory for encoder_forward.1']
    #allocation7 [shape = 'u8[1024]{0}', space=vmem, size = 0x400, scoped, tag = 'output window, operand 0, single buffered']
    %12 = vsyncpa [#allocation3], 0
    %13 = vsyncpa [#allocation6], 0
    %14 = vsyncpa [#allocation4], 0
    // Predicated region
    $region2: #{encoder_forward.1} parent=1 // pred_check
      _
    $region3: #{encoder_forward.1} parent=1 // pred_check_branch
      %16 = sbr.rel (0) target = $region5
    $region4: #{encoder_forward.1} parent=1 // pred_region
      _
    $region5: #{encoder_forward.1} parent=1 // pred_fallthru
      _
    // Predicated region
    $region6: #{encoder_forward.1} parent=1 // pred_check
      _
    $region7: #{encoder_forward.1} parent=1 // pred_check_branch
      %18 = sbr.rel (0) target = $region9
    $region8: #{encoder_forward.1} parent=1 // pred_region
      _
    $region9: #{encoder_forward.1} parent=1 // pred_fallthru
      _
    // Predicated region
    $region10: #{encoder_forward.1} parent=1 // pred_check
      _
    $region11: #{encoder_forward.1} parent=1 // pred_check_branch
      %20 = sbr.rel (0) target = $region13
    $region12: #{encoder_forward.1} parent=1 // pred_region
      _
    $region13: #{encoder_forward.1} parent=1 // pred_fallthru
      _
    // Predicated region
    $region14: #{encoder_forward.1} parent=1 // pred_check
      _
    $region15: #{encoder_forward.1} parent=1 // pred_check_branch
      %22 = sbr.rel (0) target = $region17
    $region16: #{encoder_forward.1} parent=1 // pred_region
      %s24 = ssub.s32 4096, 4096
      %25 = vsyncadd [#allocation3], %s24
      %s26 = sshll.u32 [#allocation2], 4
      %s27 = int_to_ptr.vmem [resolvable:$true] %s26
      %32 = dma.hbm_to_vmem [thread:$0]  %s3, 4096, %s27, [#allocation3], 128, 128, 8
    $region17: #{encoder_forward.1} parent=1 // pred_fallthru
      _
    // Predicated region
    $region18: #{encoder_forward.1} parent=1 // pred_check
      _
    $region19: #{encoder_forward.1} parent=1 // pred_check_branch
      %34 = sbr.rel (0) target = $region21
    $region20: #{encoder_forward.1} parent=1 // pred_region
      _
    $region21: #{encoder_forward.1} parent=1 // pred_fallthru
      _
    // Predicated region
    $region22: #{encoder_forward.1} parent=1 // pred_check
      _
    $region23: #{encoder_forward.1} parent=1 // pred_check_branch
      %36 = sbr.rel (0) target = $region25
    $region24: #{encoder_forward.1} parent=1 // pred_region
      %s38 = ssub.s32 2048, 2048
      %39 = vsyncadd [#allocation6], %s38
      %s40 = sshll.u32 [#allocation5], 4
      %s41 = int_to_ptr.vmem [resolvable:$true] %s40
      %46 = dma.hbm_to_vmem [thread:$0]  %s5, 2048, %s41, [#allocation6], 64, 64, 4
    $region25: #{encoder_forward.1} parent=1 // pred_fallthru
      _
    // Predicated region
    $region26: #{encoder_forward.1} parent=1 // pred_check
      _
    $region27: #{encoder_forward.1} parent=1 // pred_check_branch
      %48 = sbr.rel (0) target = $region29
    $region28: #{encoder_forward.1} parent=1 // pred_region
      _
    $region29: #{encoder_forward.1} parent=1 // pred_fallthru
      _
    // Predicated region
    $region30: #{encoder_forward.1} parent=1 // pred_check
      _
    $region31: #{encoder_forward.1} parent=1 // pred_check_branch
      %50 = sbr.rel (0) target = $region33
    $region32: #{encoder_forward.1} parent=1 // pred_region
      %51 = dma.done [#allocation3], 4096
    $region33: #{encoder_forward.1} parent=1 // pred_fallthru
      _
    // Predicated region
    $region34: #{encoder_forward.1} parent=1 // pred_check
      _
    $region35: #{encoder_forward.1} parent=1 // pred_check_branch
      %53 = sbr.rel (0) target = $region37
    $region36: #{encoder_forward.1} parent=1 // pred_region
      %54 = dma.done [#allocation6], 2048
    $region37: #{encoder_forward.1} parent=1 // pred_fallthru
      _
    %v56 = vld [vmem:[%s0] sm:$0x1]
    %v57 = vld [vmem:[%s1] sm:$0xff]
    %v58 = vld [vmem:[%s1 + $0x8] sm:$0xff]
    %v59 = vld [vmem:[%s1 + $0x10] sm:$0xff]
    %v60 = vld [vmem:[%s1 + $0x18] sm:$0xff]
    %v61 = vld [vmem:[%s2] sm:$0x3]
    %v63 = vlaneseq
    %v64 = vshrl.u32 %v63, 7
    %v65 = vsub.s32 0, %v64
    %v66 = vrot.slane %v61, %v65
    %v67 = vlaneseq
    %v68 = vshrl.u32 %v67, 7
    %v69 = vsub.s32 1, %v68
    %v70 = vrot.slane %v61, %v69
    %v77 = vunpack.c.l.b16 %v57
    %v78 = vunpack.c.h.b16 %v57
    %v79 = vunpack.c.l.b16 %v58
    %v80 = vunpack.c.h.b16 %v58
    %v81 = vunpack.c.l.b16 %v59
    %v82 = vunpack.c.h.b16 %v59
    %v83 = vunpack.c.l.b16 %v60
    %v84 = vunpack.c.h.b16 %v60
    %v85 = vpack.c.b16 %v79, %v77
    %v86 = vpack.c.b16 %v80, %v78
    %v87 = vpack.c.b16 %v83, %v81
    %v88 = vpack.c.b16 %v84, %v82
    %vm93 = vcmask 261120
    %v95 = vsel %vm93, %v56, 0
    %97 = vmatprep.subr.bf16.mxu0 0
    %98 = vmatpush1.bf16.msra.mxu0 0
    %99 = vmatprep.subr.bf16.mxu0 0
    %100 = vmatpush1.bf16.msra.mxu0 0
    %101 = vmatprep.subr.bf16.mxu0 0
    %102 = vmatpush1.bf16.msra.mxu0 0
    %103 = vmatprep.subr.bf16.mxu0 0
    %104 = vmatpush1.bf16.msra.mxu0 0
    %105 = vmatprep.subr.bf16.mxu0 0
    %106 = vmatpush1.bf16.msra.mxu0 0
    %107 = vmatprep.subr.bf16.mxu0 0
    %108 = vmatpush1.bf16.msra.mxu0 0
    %109 = vmatprep.subr.bf16.mxu0 %v88
    %110 = vmatpush1.bf16.msra.mxu0 %v87
    %111 = vmatprep.subr.bf16.mxu0 %v86
    %112 = vmatpush1.bf16.msra.mxu0 %v85
    %113 = vmatprep.subr.bf16.mxu0 0
    %114 = vmatpush2.bf16.msra.mxu0 0
    %115 = vmatprep.subr.bf16.mxu0 0
    %116 = vmatpush2.bf16.msra.mxu0 0
    %117 = vmatprep.subr.bf16.mxu0 0
    %118 = vmatpush2.bf16.msra.mxu0 0
    %119 = vmatprep.subr.bf16.mxu0 0
    %120 = vmatpush2.bf16.msra.mxu0 0
    %121 = vmatprep.subr.bf16.mxu0 0
    %122 = vmatpush2.bf16.msra.mxu0 0
    %123 = vmatprep.subr.bf16.mxu0 0
    %124 = vmatpush2.bf16.msra.mxu0 0
    %125 = vmatprep.subr.bf16.mxu0 0
    %126 = vmatpush2.bf16.msra.mxu0 0
    %127 = vmatprep.subr.bf16.mxu0 0
    %128 = vmatpush2.bf16.msra.mxu0 0
    %129 = vmatprep.mubr.bf16.mxu0 0
    %130 = vmatmul.mubr.bf16.gmra.mxu0 %v95
    %v131 = vpop.f32.mrf.mxu0
    %v132 = vadd.f32 %v66, %v131
    %v133 = vpop.f32.mrf.mxu0
    %v134 = vadd.f32 %v70, %v133
    %v135 = vpop.f32.mrf.mxu0
    %v136 = vpop.f32.mrf.mxu0
    %137 = vdwg.mxu0
    %vm138 = vcmp.gt.f32.partialorder %v132, 0.0
    %vm139 = vcmp.gt.f32.partialorder %v134, 0.0
    %v140 = vmul.f32 %v132, 0.2
    %v141 = vmul.f32 %v134, 0.2
    %v142 = vsel %vm138, %v132, %v140
    %v143 = vsel %vm139, %v134, %v141
    %v144 = vpack.c.bf16 %v142, %v142
    %v145 = vpack.c.bf16 %v143, %v143
    %v146 = vld [vmem:[#allocation2] sm:$0xff]
    %v147 = vld [vmem:[#allocation2 + $0x8] sm:$0xff]
    %v148 = vld [vmem:[#allocation2 + $0x10] sm:$0xff]
    %v149 = vld [vmem:[#allocation2 + $0x18] sm:$0xff]
    %v150 = vld [vmem:[#allocation2 + $0x20] sm:$0xff]
    %v151 = vld [vmem:[#allocation2 + $0x28] sm:$0xff]
    %v152 = vld [vmem:[#allocation2 + $0x30] sm:$0xff]
    %v153 = vld [vmem:[#allocation2 + $0x38] sm:$0xff]
    %v154 = vld [vmem:[#allocation2 + $0x40] sm:$0xff]
    %v155 = vld [vmem:[#allocation2 + $0x48] sm:$0xff]
    %v156 = vld [vmem:[#allocation2 + $0x50] sm:$0xff]
    %v157 = vld [vmem:[#allocation2 + $0x58] sm:$0xff]
    %v158 = vld [vmem:[#allocation2 + $0x60] sm:$0xff]
    %v159 = vld [vmem:[#allocation2 + $0x68] sm:$0xff]
    %v160 = vld [vmem:[#allocation2 + $0x70] sm:$0xff]
    %v161 = vld [vmem:[#allocation2 + $0x78] sm:$0xff]
    %v162 = vld [vmem:[#allocation2 + $0x80] sm:$0xff]
    %v163 = vld [vmem:[#allocation2 + $0x88] sm:$0xff]
    %v164 = vld [vmem:[#allocation2 + $0x90] sm:$0xff]
    %v165 = vld [vmem:[#allocation2 + $0x98] sm:$0xff]
    %v166 = vld [vmem:[#allocation2 + $0xa0] sm:$0xff]
    %v167 = vld [vmem:[#allocation2 + $0xa8] sm:$0xff]
    %v168 = vld [vmem:[#allocation2 + $0xb0] sm:$0xff]
    %v169 = vld [vmem:[#allocation2 + $0xb8] sm:$0xff]
    %v170 = vld [vmem:[#allocation2 + $0xc0] sm:$0xff]
    %v171 = vld [vmem:[#allocation2 + $0xc8] sm:$0xff]
    %v172 = vld [vmem:[#allocation2 + $0xd0] sm:$0xff]
    %v173 = vld [vmem:[#allocation2 + $0xd8] sm:$0xff]
    %v174 = vld [vmem:[#allocation2 + $0xe0] sm:$0xff]
    %v175 = vld [vmem:[#allocation2 + $0xe8] sm:$0xff]
    %v176 = vld [vmem:[#allocation2 + $0xf0] sm:$0xff]
    %v177 = vld [vmem:[#allocation2 + $0xf8] sm:$0xff]
    %v178 = vld [vmem:[%s4] sm:$0x3]
    %v180 = vlaneseq
    %v181 = vshrl.u32 %v180, 7
    %v182 = vsub.s32 0, %v181
    %v183 = vrot.slane %v178, %v182
    %v184 = vlaneseq
    %v185 = vshrl.u32 %v184, 7
    %v186 = vsub.s32 1, %v185
    %v187 = vrot.slane %v178, %v186
    %v222 = vunpack.c.l.b16 %v146
    %v223 = vunpack.c.h.b16 %v146
    %v224 = vunpack.c.l.b16 %v147
    %v225 = vunpack.c.h.b16 %v147
    %v226 = vunpack.c.l.b16 %v148
    %v227 = vunpack.c.h.b16 %v148
    %v228 = vunpack.c.l.b16 %v149
    %v229 = vunpack.c.h.b16 %v149
    %v230 = vunpack.c.l.b16 %v150
    %v231 = vunpack.c.h.b16 %v150
    %v232 = vunpack.c.l.b16 %v151
    %v233 = vunpack.c.h.b16 %v151
    %v234 = vunpack.c.l.b16 %v152
    %v235 = vunpack.c.h.b16 %v152
    %v236 = vunpack.c.l.b16 %v153
    %v237 = vunpack.c.h.b16 %v153
    %v238 = vunpack.c.l.b16 %v154
    %v239 = vunpack.c.h.b16 %v154
    %v240 = vunpack.c.l.b16 %v155
    %v241 = vunpack.c.h.b16 %v155
    %v242 = vunpack.c.l.b16 %v156
    %v243 = vunpack.c.h.b16 %v156
    %v244 = vunpack.c.l.b16 %v157
    %v245 = vunpack.c.h.b16 %v157
    %v246 = vunpack.c.l.b16 %v158
    %v247 = vunpack.c.h.b16 %v158
    %v248 = vunpack.c.l.b16 %v159
    %v249 = vunpack.c.h.b16 %v159
    %v250 = vunpack.c.l.b16 %v160
    %v251 = vunpack.c.h.b16 %v160
    %v252 = vunpack.c.l.b16 %v161
    %v253 = vunpack.c.h.b16 %v161
    %v254 = vunpack.c.l.b16 %v162
    %v255 = vunpack.c.h.b16 %v162
    %v256 = vunpack.c.l.b16 %v163
    %v257 = vunpack.c.h.b16 %v163
    %v258 = vunpack.c.l.b16 %v164
    %v259 = vunpack.c.h.b16 %v164
    %v260 = vunpack.c.l.b16 %v165
    %v261 = vunpack.c.h.b16 %v165
    %v262 = vunpack.c.l.b16 %v166
    %v263 = vunpack.c.h.b16 %v166
    %v264 = vunpack.c.l.b16 %v167
    %v265 = vunpack.c.h.b16 %v167
    %v266 = vunpack.c.l.b16 %v168
    %v267 = vunpack.c.h.b16 %v168
    %v268 = vunpack.c.l.b16 %v169
    %v269 = vunpack.c.h.b16 %v169
    %v270 = vunpack.c.l.b16 %v170
    %v271 = vunpack.c.h.b16 %v170
    %v272 = vunpack.c.l.b16 %v171
    %v273 = vunpack.c.h.b16 %v171
    %v274 = vunpack.c.l.b16 %v172
    %v275 = vunpack.c.h.b16 %v172
    %v276 = vunpack.c.l.b16 %v173
    %v277 = vunpack.c.h.b16 %v173
    %v278 = vunpack.c.l.b16 %v174
    %v279 = vunpack.c.h.b16 %v174
    %v280 = vunpack.c.l.b16 %v175
    %v281 = vunpack.c.h.b16 %v175
    %v282 = vunpack.c.l.b16 %v176
    %v283 = vunpack.c.h.b16 %v176
    %v284 = vunpack.c.l.b16 %v177
    %v285 = vunpack.c.h.b16 %v177
    %v286 = vpack.c.b16 %v224, %v222
    %v287 = vpack.c.b16 %v225, %v223
    %v288 = vpack.c.b16 %v228, %v226
    %v289 = vpack.c.b16 %v229, %v227
    %v290 = vpack.c.b16 %v232, %v230
    %v291 = vpack.c.b16 %v233, %v231
    %v292 = vpack.c.b16 %v236, %v234
    %v293 = vpack.c.b16 %v237, %v235
    %v294 = vpack.c.b16 %v240, %v238
    %v295 = vpack.c.b16 %v241, %v239
    %v296 = vpack.c.b16 %v244, %v242
    %v297 = vpack.c.b16 %v245, %v243
    %v298 = vpack.c.b16 %v248, %v246
    %v299 = vpack.c.b16 %v249, %v247
    %v300 = vpack.c.b16 %v252, %v250
    %v301 = vpack.c.b16 %v253, %v251
    %v302 = vpack.c.b16 %v256, %v254
    %v303 = vpack.c.b16 %v257, %v255
    %v304 = vpack.c.b16 %v260, %v258
    %v305 = vpack.c.b16 %v261, %v259
    %v306 = vpack.c.b16 %v264, %v262
    %v307 = vpack.c.b16 %v265, %v263
    %v308 = vpack.c.b16 %v268, %v266
    %v309 = vpack.c.b16 %v269, %v267
    %v310 = vpack.c.b16 %v272, %v270
    %v311 = vpack.c.b16 %v273, %v271
    %v312 = vpack.c.b16 %v276, %v274
    %v313 = vpack.c.b16 %v277, %v275
    %v314 = vpack.c.b16 %v280, %v278
    %v315 = vpack.c.b16 %v281, %v279
    %v316 = vpack.c.b16 %v284, %v282
    %v317 = vpack.c.b16 %v285, %v283
    %350 = vmatprep.subr.bf16.mxu0 %v301
    %351 = vmatpush1.bf16.msra.mxu0 %v300
    %352 = vmatprep.subr.bf16.mxu0 %v299
    %353 = vmatpush1.bf16.msra.mxu0 %v298
    %354 = vmatprep.subr.bf16.mxu0 %v297
    %355 = vmatpush1.bf16.msra.mxu0 %v296
    %356 = vmatprep.subr.bf16.mxu0 %v295
    %357 = vmatpush1.bf16.msra.mxu0 %v294
    %358 = vmatprep.subr.bf16.mxu0 %v293
    %359 = vmatpush1.bf16.msra.mxu0 %v292
    %360 = vmatprep.subr.bf16.mxu0 %v291
    %361 = vmatpush1.bf16.msra.mxu0 %v290
    %362 = vmatprep.subr.bf16.mxu0 %v289
    %363 = vmatpush1.bf16.msra.mxu0 %v288
    %364 = vmatprep.subr.bf16.mxu0 %v287
    %365 = vmatpush1.bf16.msra.mxu0 %v286
    %366 = vmatprep.subr.bf16.mxu0 %v317
    %367 = vmatpush2.bf16.msra.mxu0 %v316
    %368 = vmatprep.subr.bf16.mxu0 %v315
    %369 = vmatpush2.bf16.msra.mxu0 %v314
    %370 = vmatprep.subr.bf16.mxu0 %v313
    %371 = vmatpush2.bf16.msra.mxu0 %v312
    %372 = vmatprep.subr.bf16.mxu0 %v311
    %373 = vmatpush2.bf16.msra.mxu0 %v310
    %374 = vmatprep.subr.bf16.mxu0 %v309
    %375 = vmatpush2.bf16.msra.mxu0 %v308
    %376 = vmatprep.subr.bf16.mxu0 %v307
    %377 = vmatpush2.bf16.msra.mxu0 %v306
    %378 = vmatprep.subr.bf16.mxu0 %v305
    %379 = vmatpush2.bf16.msra.mxu0 %v304
    %380 = vmatprep.subr.bf16.mxu0 %v303
    %381 = vmatpush2.bf16.msra.mxu0 %v302
    %382 = vmatprep.mubr.bf16.mxu0 %v145
    %383 = vmatmul.mubr.bf16.gmra.mxu0 %v144
    %v384 = vpop.f32.mrf.mxu0
    %v385 = vadd.f32 %v183, %v384
    %v386 = vpop.f32.mrf.mxu0
    %v387 = vadd.f32 %v187, %v386
    %v388 = vpop.f32.mrf.mxu0
    %v389 = vpop.f32.mrf.mxu0
    %390 = vdwg.mxu0
    %vm391 = vcmp.gt.f32.partialorder %v385, 0.0
    %vm392 = vcmp.gt.f32.partialorder %v387, 0.0
    %v393 = vmul.f32 %v385, 0.2
    %v394 = vmul.f32 %v387, 0.2
    %v395 = vsel %vm391, %v385, %v393
    %v396 = vsel %vm392, %v387, %v394
    %v397 = vpack.c.bf16 %v395, %v395
    %v398 = vpack.c.bf16 %v396, %v396
    %v399 = vld [vmem:[#allocation5] sm:$0xf]
    %v400 = vld [vmem:[#allocation5 + $0x4] sm:$0xf]
    %v401 = vld [vmem:[#allocation5 + $0x8] sm:$0xf]
    %v402 = vld [vmem:[#allocation5 + $0xc] sm:$0xf]
    %v403 = vld [vmem:[#allocation5 + $0x10] sm:$0xf]
    %v404 = vld [vmem:[#allocation5 + $0x14] sm:$0xf]
    %v405 = vld [vmem:[#allocation5 + $0x18] sm:$0xf]
    %v406 = vld [vmem:[#allocation5 + $0x1c] sm:$0xf]
    %v407 = vld [vmem:[#allocation5 + $0x20] sm:$0xf]
    %v408 = vld [vmem:[#allocation5 + $0x24] sm:$0xf]
    %v409 = vld [vmem:[#allocation5 + $0x28] sm:$0xf]
    %v410 = vld [vmem:[#allocation5 + $0x2c] sm:$0xf]
    %v411 = vld [vmem:[#allocation5 + $0x30] sm:$0xf]
    %v412 = vld [vmem:[#allocation5 + $0x34] sm:$0xf]
    %v413 = vld [vmem:[#allocation5 + $0x38] sm:$0xf]
    %v414 = vld [vmem:[#allocation5 + $0x3c] sm:$0xf]
    %v415 = vld [vmem:[#allocation5 + $0x40] sm:$0xf]
    %v416 = vld [vmem:[#allocation5 + $0x44] sm:$0xf]
    %v417 = vld [vmem:[#allocation5 + $0x48] sm:$0xf]
    %v418 = vld [vmem:[#allocation5 + $0x4c] sm:$0xf]
    %v419 = vld [vmem:[#allocation5 + $0x50] sm:$0xf]
    %v420 = vld [vmem:[#allocation5 + $0x54] sm:$0xf]
    %v421 = vld [vmem:[#allocation5 + $0x58] sm:$0xf]
    %v422 = vld [vmem:[#allocation5 + $0x5c] sm:$0xf]
    %v423 = vld [vmem:[#allocation5 + $0x60] sm:$0xf]
    %v424 = vld [vmem:[#allocation5 + $0x64] sm:$0xf]
    %v425 = vld [vmem:[#allocation5 + $0x68] sm:$0xf]
    %v426 = vld [vmem:[#allocation5 + $0x6c] sm:$0xf]
    %v427 = vld [vmem:[#allocation5 + $0x70] sm:$0xf]
    %v428 = vld [vmem:[#allocation5 + $0x74] sm:$0xf]
    %v429 = vld [vmem:[#allocation5 + $0x78] sm:$0xf]
    %v430 = vld [vmem:[#allocation5 + $0x7c] sm:$0xf]
    %v431 = vld [vmem:[%s6] sm:$0x1]
    %v433 = vlaneseq
    %v434 = vshrl.u32 %v433, 7
    %v435 = vsub.s32 0, %v434
    %v436 = vrot.slane %v431, %v435
    %v470 = vunpack.c.l.b16 %v399
    %v471 = vunpack.c.l.b16 %v400
    %v472 = vunpack.c.l.b16 %v401
    %v473 = vunpack.c.l.b16 %v402
    %v474 = vunpack.c.l.b16 %v403
    %v475 = vunpack.c.l.b16 %v404
    %v476 = vunpack.c.l.b16 %v405
    %v477 = vunpack.c.l.b16 %v406
    %v478 = vunpack.c.l.b16 %v407
    %v479 = vunpack.c.l.b16 %v408
    %v480 = vunpack.c.l.b16 %v409
    %v481 = vunpack.c.l.b16 %v410
    %v482 = vunpack.c.l.b16 %v411
    %v483 = vunpack.c.l.b16 %v412
    %v484 = vunpack.c.l.b16 %v413
    %v485 = vunpack.c.l.b16 %v414
    %v486 = vunpack.c.l.b16 %v415
    %v487 = vunpack.c.l.b16 %v416
    %v488 = vunpack.c.l.b16 %v417
    %v489 = vunpack.c.l.b16 %v418
    %v490 = vunpack.c.l.b16 %v419
    %v491 = vunpack.c.l.b16 %v420
    %v492 = vunpack.c.l.b16 %v421
    %v493 = vunpack.c.l.b16 %v422
    %v494 = vunpack.c.l.b16 %v423
    %v495 = vunpack.c.l.b16 %v424
    %v496 = vunpack.c.l.b16 %v425
    %v497 = vunpack.c.l.b16 %v426
    %v498 = vunpack.c.l.b16 %v427
    %v499 = vunpack.c.l.b16 %v428
    %v500 = vunpack.c.l.b16 %v429
    %v501 = vunpack.c.l.b16 %v430
    %v502 = vpack.c.b16 %v471, %v470
    %v503 = vpack.c.b16 %v473, %v472
    %v504 = vpack.c.b16 %v475, %v474
    %v505 = vpack.c.b16 %v477, %v476
    %v506 = vpack.c.b16 %v479, %v478
    %v507 = vpack.c.b16 %v481, %v480
    %v508 = vpack.c.b16 %v483, %v482
    %v509 = vpack.c.b16 %v485, %v484
    %v510 = vpack.c.b16 %v487, %v486
    %v511 = vpack.c.b16 %v489, %v488
    %v512 = vpack.c.b16 %v491, %v490
    %v513 = vpack.c.b16 %v493, %v492
    %v514 = vpack.c.b16 %v495, %v494
    %v515 = vpack.c.b16 %v497, %v496
    %v516 = vpack.c.b16 %v499, %v498
    %v517 = vpack.c.b16 %v501, %v500
    %534 = vmatprep.subr.bf16.mxu0 0
    %535 = vmatpush1.bf16.msra.mxu0 %v509
    %536 = vmatprep.subr.bf16.mxu0 0
    %537 = vmatpush1.bf16.msra.mxu0 %v508
    %538 = vmatprep.subr.bf16.mxu0 0
    %539 = vmatpush1.bf16.msra.mxu0 %v507
    %540 = vmatprep.subr.bf16.mxu0 0
    %541 = vmatpush1.bf16.msra.mxu0 %v506
    %542 = vmatprep.subr.bf16.mxu0 0
    %543 = vmatpush1.bf16.msra.mxu0 %v505
    %544 = vmatprep.subr.bf16.mxu0 0
    %545 = vmatpush1.bf16.msra.mxu0 %v504
    %546 = vmatprep.subr.bf16.mxu0 0
    %547 = vmatpush1.bf16.msra.mxu0 %v503
    %548 = vmatprep.subr.bf16.mxu0 0
    %549 = vmatpush1.bf16.msra.mxu0 %v502
    %550 = vmatprep.subr.bf16.mxu0 0
    %551 = vmatpush2.bf16.msra.mxu0 %v517
    %552 = vmatprep.subr.bf16.mxu0 0
    %553 = vmatpush2.bf16.msra.mxu0 %v516
    %554 = vmatprep.subr.bf16.mxu0 0
    %555 = vmatpush2.bf16.msra.mxu0 %v515
    %556 = vmatprep.subr.bf16.mxu0 0
    %557 = vmatpush2.bf16.msra.mxu0 %v514
    %558 = vmatprep.subr.bf16.mxu0 0
    %559 = vmatpush2.bf16.msra.mxu0 %v513
    %560 = vmatprep.subr.bf16.mxu0 0
    %561 = vmatpush2.bf16.msra.mxu0 %v512
    %562 = vmatprep.subr.bf16.mxu0 0
    %563 = vmatpush2.bf16.msra.mxu0 %v511
    %564 = vmatprep.subr.bf16.mxu0 0
    %565 = vmatpush2.bf16.msra.mxu0 %v510
    %566 = vmatprep.mubr.bf16.mxu0 %v398
    %567 = vmatmul.mubr.bf16.gmra.mxu0 %v397
    %v568 = vpop.f32.mrf.mxu0
    %v569 = vadd.f32 %v436, %v568
    %v570 = vpop.f32.mrf.mxu0
    %v571 = vpop.f32.mrf.mxu0
    %v572 = vpop.f32.mrf.mxu0
    %573 = vdwg.mxu0
    %574 = vst [vmem:[#allocation7] sm:$0x3] %v569
    // Predicated region
    $region38: #{encoder_forward.1} parent=1 // pred_check
      _
    $region39: #{encoder_forward.1} parent=1 // pred_check_branch
      %576 = sbr.rel (0) target = $region41
    $region40: #{encoder_forward.1} parent=1 // pred_region
      %s578 = ssub.s32 32, 32
      %579 = vsyncadd [#allocation4], %s578
      %s581 = sshll.u32 [#allocation7], 4
      %s582 = int_to_ptr.vmem [resolvable:$true] %s581
      %584 = dma.vmem_to_hbm [thread:$0]  %s582, 32, %s7, [#allocation4]
    $region41: #{encoder_forward.1} parent=1 // pred_fallthru
      _
    // Predicated region
    $region42: #{encoder_forward.1} parent=1 // pred_check
      _
    $region43: #{encoder_forward.1} parent=1 // pred_check_branch
      %586 = sbr.rel (0) target = $region45
    $region44: #{encoder_forward.1} parent=1 // pred_region
      %587 = dma.done [#allocation4], 32
    $region45: #{encoder_forward.1} parent=1 // pred_fallthru
      _
    %588 = vsyncpa [#allocation3], 1
    %589 = vsyncpa [#allocation6], 1
    %590 = vsyncpa [#allocation4], 1

</llo_original>
